<compile_context>
chip_gen: v6e
topology: v6e:2x2x1
jax: 0.10.0
libtpu: 0.0.40
codegen_flags: <defaults>
</compile_context>

<pallas_src>
import functools

import jax
import jax.numpy as jnp
from jax.experimental import pallas as pl
from jax.experimental.pallas import tpu as pltpu


# ---------------------------------------------------------------------------
# Helpers: padding, tile selection, per-generation VMEM budget
# ---------------------------------------------------------------------------
def _round_up(x, m):
    return ((x + m - 1) // m) * m


def _pad_dim(x, axis, size):
    cur = x.shape[axis]
    if cur == size:
        return x
    pad = [(0, 0)] * x.ndim
    pad[axis] = (0, size - cur)
    return jnp.pad(x, pad)


def _padded_elems(shape):
    """Element count after TPU (8,128) minor-tile padding."""
    s = list(shape)
    s[-1] = _round_up(s[-1], 128)
    if len(s) >= 2:
        s[-2] = _round_up(s[-2], 8)
    n = 1
    for d in s:
        n *= d
    return n


def _vmem_cap_bytes():
    phys = 64 * 1024 * 1024            # conservative default (v7x physical VMEM)
    try:
        phys = int(pltpu.get_tpu_info().vmem_capacity_bytes)
    except Exception:
        pass
    return int(phys * 0.6)             # headroom for compiler-internal scratch


def _choose_tiles(B, n_send, n_recv, H, A, D3, De, Do):
    cap = _vmem_cap_bytes()

    # Batch tile: keep >= 2 steps on the "parallel" axis (both v7x cores get work).
    tb = 1
    for cand in (8, 4, 2, 1):
        if cand <= max(1, B // 2) and B % cand == 0:
            tb = cand
            break

    # Sender tile: multiple of 128 (lane-dense) when possible, else the whole axis.
    tj = n_send
    if n_send % 128 == 0:
        for k in (4, 3, 2, 1):
            if n_send % (128 * k) == 0:
                tj = 128 * k
                break

    # Receiver tile: bounds the (tb, ti, De, tj) elementwise temporaries.
    ti = n_recv
    for cand in (16, 8):
        if n_recv % cand == 0:
            ti = cand
            break

    def fits(tb_, tj_, ti_):
        f = 4
        blocks = 2 * (tb_ * _padded_elems((n_send, H))               # x (double-buffered)
                      + tb_ * _padded_elems((n_send, A))             # node_attr
                      + tb_ * D3 * _padded_elems((n_recv, tj_))      # edge tile
                      + tb_ * _padded_elems((n_recv, tj_))           # adj tile
                      + tb_ * _padded_elems((n_recv, Do)))           # out tile
        weights = 2 * (_padded_elems((D3, De)) + _padded_elems((H, 2 * De + Do))
                       + _padded_elems((A, 2 * De + Do)) + _padded_elems((1, De))
                       + _padded_elems((De, Do)) + _padded_elems((1, Do)))
        scratch = tb_ * (2 * _padded_elems((n_recv, De))
                         + _padded_elems((De, n_send))
                         + _padded_elems((n_recv, Do)))
        chain = 4 * tb_ * ti_ * _padded_elems((De, tj_))             # pre/edge_code temps
        return (blocks + weights + scratch + chain) * f <= cap

    while not fits(tb, tj, ti):
        if ti > 8 and ti % 2 == 0 and n_recv % (ti // 2) == 0:
            ti //= 2
        elif tj > 128 and n_send % 128 == 0:
            tj = 128
        elif tb > 1:
            tb = max(c for c in (1, 2, 4, 8) if c < tb and B % c == 0)
        else:
            break
    return tb, tj, ti, cap


# ---------------------------------------------------------------------------
# GraphInteractionLayer kernel
# ---------------------------------------------------------------------------
def _gil_kernel(x_ref, na_ref, edge_ref, adj_ref,
                we_e_ref, w_big_x_ref, w_big_a_ref, be_ref, wn_g_ref, bn_ref,
                out_ref,
                recv_ref, send_t_ref, nodep_ref, agg_ref,
                *, ti, out_slope, chain_dtype):
    j = pl.program_id(1)
    nj = pl.num_programs(1)

    tb, n_send, hx = x_ref.shape
    na_dim = na_ref.shape[-1]
    d3 = we_e_ref.shape[0]
    de = be_ref.shape[-1]
    do = bn_ref.shape[-1]
    n_recv = adj_ref.shape[1]
    tj = adj_ref.shape[2]

    # ---- once per batch block: fused per-node projections -------------------
    #      big = [receiver | sender | node_processor node-part]  (one dot per input)
    @pl.when(j == 0)
    def _init():
        x2d = x_ref[...].reshape(tb * n_send, hx)
        na2d = na_ref[...].reshape(tb * n_send, na_dim)
        big = (jnp.dot(x2d, w_big_x_ref[...], preferred_element_type=jnp.float32)
               + jnp.dot(na2d, w_big_a_ref[...], preferred_element_type=jnp.float32))
        big = big.reshape(tb, n_send, 2 * de + do)
        recv_ref[...] = big[:, :n_recv, :de] + be_ref[0][None, None, :]       # edge bias folded
        send_t_ref[...] = jnp.transpose(big[:, :, de:2 * de], (0, 2, 1))      # (tb, de, n_send)
        nodep_ref[...] = big[:, :n_recv, 2 * de:] + bn_ref[0][None, None, :]  # node bias folded
        agg_ref[...] = jnp.zeros_like(agg_ref)

    # ---- edge-message chain for this sender tile (lane axis = senders) ------
    j0 = j * tj
    if tj % 128 == 0:
        j0 = pl.multiple_of(j0, 128)
    elif tj % 8 == 0:
        j0 = pl.multiple_of(j0, 8)
    send_tile = send_t_ref[:, :, pl.ds(j0, tj)].astype(chain_dtype)           # (tb, de, tj)
    we_e = we_e_ref[...].astype(chain_dtype)                                  # (d3, de)

    def recv_chunk(i0):
        recv_c = recv_ref[:, pl.ds(i0, ti), :].astype(chain_dtype)            # (tb, ti, de)
        adj_c = adj_ref[:, pl.ds(i0, ti), :].astype(chain_dtype)              # (tb, ti, tj)
        # pre[b,i,d,s] = recv[b,i,d] + send[b,d,s] + sum_k edge[b,k,i,s] * We_e[k,d]
        pre = recv_c[:, :, :, None] + send_tile[:, None, :, :]                # (tb, ti, de, tj)
        for k in range(d3):                                                   # tiny-K: VPU FMAs
            ek = edge_ref[:, k, pl.ds(i0, ti), :].astype(chain_dtype)         # (tb, ti, tj)
            pre = pre + ek[:, :, None, :] * we_e[k][None, None, :, None]
        ec = jnp.maximum(pre, 0.01 * pre)                                     # leaky_relu(0.01), 2 ops
        part = jnp.sum(ec * adj_c[:, :, None, :], axis=-1)                    # XLU lane-reduce -> (tb, ti, de)
        agg_ref[:, pl.ds(i0, ti), :] += part.astype(jnp.float32)

    n_chunks = n_recv // ti
    if n_chunks <= 1:
        recv_chunk(0)
    else:
        @pl.loop(0, n_chunks)
        def _(i):
            i0 = i * ti
            if ti % 8 == 0:
                i0 = pl.multiple_of(i0, 8)
            recv_chunk(i0)

    # ---- last sender tile: node_processor (node part precomputed at init) ---
    @pl.when(j == nj - 1)
    def _finalize():
        agg2d = agg_ref[...].reshape(tb * n_recv, de)
        out = (nodep_ref[...].reshape(tb * n_recv, do)
               + jnp.dot(agg2d, wn_g_ref[...], preferred_element_type=jnp.float32))
        if out_slope is not None:                      # GIN-level leaky_relu fused in
            out = jnp.maximum(out, out_slope * out)
        out_ref[...] = out.reshape(tb, n_recv, do).astype(out_ref.dtype)


def graph_interaction_layer(x, node_attr, edge_t, adj, prep, *,
                            out_slope=None, chain_dtype=jnp.float32):
    """One GraphInteractionLayer.

    x:         (B, Ns, H)       node code (senders; zero-padded rows allowed)
    node_attr: (B, Ns, A)       raw node attributes
    edge_t:    (B, D3, Nr, Ns)  edge attributes (feature axis hoisted out of the minor dims)
    adj:       (B, Nr, Ns)
    Returns    (B, Nr, Do)
    """
    B, Ns, H = x.shape
    A = node_attr.shape[-1]
    D3, Nr = edge_t.shape[1], edge_t.shape[2]
    De = prep["be2"].shape[-1]
    Do = prep["bn2"].shape[-1]

    tb, tj, ti, vmem_cap = _choose_tiles(B, Ns, Nr, H, A, D3, De, Do)
    grid = (B // tb, Ns // tj)

    kernel = functools.partial(_gil_kernel, ti=ti, out_slope=out_slope,
                               chain_dtype=chain_dtype)

    return pl.pallas_call(
        kernel,
        out_shape=jax.ShapeDtypeStruct((B, Nr, Do), x.dtype),
        grid=grid,
        in_specs=[
            pl.BlockSpec((tb, Ns, H), lambda b, j: (b, 0, 0)),           # x (senders)
            pl.BlockSpec((tb, Ns, A), lambda b, j: (b, 0, 0)),           # node_attr
            pl.BlockSpec((tb, D3, Nr, tj), lambda b, j: (b, 0, 0, j)),   # edge (lane-dense, sender-tiled)
            pl.BlockSpec((tb, Nr, tj), lambda b, j: (b, 0, j)),          # adj (sender-tiled)
            pl.BlockSpec((D3, De), lambda b, j: (0, 0)),                 # We_edge
            pl.BlockSpec((H, 2 * De + Do), lambda b, j: (0, 0)),         # [W_recv|W_send|Wn]_x
            pl.BlockSpec((A, 2 * De + Do), lambda b, j: (0, 0)),         # [W_recv|W_send|Wn]_na
            pl.BlockSpec((1, De), lambda b, j: (0, 0)),                  # be
            pl.BlockSpec((De, Do), lambda b, j: (0, 0)),                 # Wn_agg
            pl.BlockSpec((1, Do), lambda b, j: (0, 0)),                  # bn
        ],
        out_specs=pl.BlockSpec((tb, Nr, Do), lambda b, j: (b, 0, 0)),
        scratch_shapes=[
            pltpu.VMEM((tb, Nr, De), jnp.float32),   # receiver projection (+bias)
            pltpu.VMEM((tb, De, Ns), jnp.float32),   # sender projection, transposed (lane = sender)
            pltpu.VMEM((tb, Nr, Do), jnp.float32),   # node_processor node contribution (+bias)
            pltpu.VMEM((tb, Nr, De), jnp.float32),   # edge_agg accumulator
        ],
        compiler_params=pltpu.CompilerParams(
            dimension_semantics=("parallel", "arbitrary"),
            vmem_limit_bytes=vmem_cap),
    )(x, node_attr, edge_t, adj,
      prep["we_e"], prep["w_big_x"], prep["w_big_a"], prep["be2"],
      prep["wn_g"], prep["bn2"])


# ---------------------------------------------------------------------------
# Node encoder (Linear + LeakyReLU(0.1)) and MLP head (tanh/tanh/sigmoid)
# ---------------------------------------------------------------------------
def _node_encoder_kernel(x_ref, w_ref, b_ref, o_ref):
    b, n, a = x_ref.shape
    h = w_ref.shape[-1]
    y = jnp.dot(x_ref[...].reshape(b * n, a), w_ref[...],
                preferred_element_type=jnp.float32) + b_ref[0][None, :]
    y = jnp.maximum(y, 0.1 * y)
    o_ref[...] = y.reshape(b, n, h).astype(o_ref.dtype)


def node_encoder(node_attr, enc_params):
    B, N, _ = node_attr.shape
    W, b = enc_params["W"], enc_params["b"]
    H = W.shape[0]
    return pl.pallas_call(
        _node_encoder_kernel,
        out_shape=jax.ShapeDtypeStruct((B, N, H), node_attr.dtype),
    )(node_attr, jnp.transpose(W), b.reshape(1, H))


def _head_kernel(x_ref, w1_ref, b1_ref, w2_ref, b2_ref, w3_ref, b3_ref, o_ref):
    h = jnp.tanh(jnp.dot(x_ref[...], w1_ref[...],
                         preferred_element_type=jnp.float32) + b1_ref[0][None, :])
    h = jnp.tanh(jnp.dot(h, w2_ref[...],
                         preferred_element_type=jnp.float32) + b2_ref[0][None, :])
    h = jnp.dot(h, w3_ref[...], preferred_element_type=jnp.float32) + b3_ref[0][None, :]
    o_ref[...] = (1.0 / (1.0 + jnp.exp(-h))).astype(o_ref.dtype)     # sigmoid


def mlp_head(gnn_code, head_params):
    B = gnn_code.shape[0]
    n_out = head_params["W3"].shape[0]
    return pl.pallas_call(
        _head_kernel,
        out_shape=jax.ShapeDtypeStruct((B, n_out), gnn_code.dtype),
    )(gnn_code,
      jnp.transpose(head_params["W1"]), head_params["b1"].reshape(1, -1),
      jnp.transpose(head_params["W2"]), head_params["b2"].reshape(1, -1),
      jnp.transpose(head_params["W3"]), head_params["b3"].reshape(1, -1))


# ---------------------------------------------------------------------------
# Weight preparation (PyTorch (out,in) Linear layout -> kernel layout)
# ---------------------------------------------------------------------------
def _prepare_gil_params(p, H, A, D3):
    We, be, Wn, bn = p["We"], p["be"], p["Wn"], p["bn"]
    De = We.shape[0]
    Do = Wn.shape[0]
    D1 = H + A
    # edge_processor input columns: [edge_attr | receiver(x|na) | sender(x|na)]
    we_e = We[:, :D3].T                                    # (D3, De)
    w_recv_x = We[:, D3:D3 + H].T                          # (H, De)
    w_recv_a = We[:, D3 + H:D3 + D1].T                     # (A, De)
    w_send_x = We[:, D3 + D1:D3 + D1 + H].T                # (H, De)
    w_send_a = We[:, D3 + D1 + H:].T                       # (A, De)
    # node_processor input columns: [x | na | edge_agg]
    wn_x = Wn[:, :H].T                                     # (H, Do)
    wn_a = Wn[:, H:D1].T                                   # (A, Do)
    wn_g = Wn[:, D1:].T                                    # (De, Do)
    return {
        "we_e": we_e,
        "w_big_x": jnp.concatenate([w_recv_x, w_send_x, wn_x], axis=1),   # (H, 2De+Do)
        "w_big_a": jnp.concatenate([w_recv_a, w_send_a, wn_a], axis=1),   # (A, 2De+Do)
        "be2": be.reshape(1, De),
        "wn_g": wn_g,
        "bn2": bn.reshape(1, Do),
    }


# ---------------------------------------------------------------------------
# PT_GNN forward
# ---------------------------------------------------------------------------
def pt_gnn_forward(node_attr, edge_attr1, edge_attr2, adj, gnn_layers, params,
                   chain_dtype=jnp.float32):
    B, N, A = node_attr.shape
    H = params["enc"]["W"].shape[0]
    D3 = edge_attr1.shape[-1]

    # Pad the sender axis to a multiple of 128 for large, odd N (padded senders
    # contribute 0 through adj).  Small N stays untouched.
    Np = _round_up(N, 128) if (N > 128 and N % 128 != 0) else N
    na_p = _pad_dim(node_attr, 1, Np)
    adj_p = _pad_dim(adj, 2, Np)

    def run_encoder(edge_attr, gil_prep):
        # Edge transpose once per encoder (outside the layer loop): lane-dense tiles.
        edge_t = _pad_dim(jnp.transpose(edge_attr, (0, 3, 1, 2)), 3, Np)   # (B, D3, N, Np)
        x = node_encoder(node_attr, params["enc"])
        for layer in range(gnn_layers):
            last = layer == gnn_layers - 1
            # The head only reads nodes 0..2: restrict the last layer's receivers
            # (padded to 8 for sublane alignment).
            n_recv = min(8, N) if last else N
            xp = _pad_dim(x, 1, Np)
            x = graph_interaction_layer(
                xp, na_p,
                edge_t[:, :, :n_recv, :] if n_recv != N else edge_t,
                adj_p[:, :n_recv, :] if n_recv != N else adj_p,
                gil_prep, out_slope=0.01, chain_dtype=chain_dtype)
        return x

    prep1 = _prepare_gil_params(params["gin1"], H, A, D3)
    prep2 = _prepare_gil_params(params["gin2"], H, A, D3)
    codes = jnp.concatenate([run_encoder(edge_attr1, prep1),
                             run_encoder(edge_attr2, prep2)], axis=2)
    gnn_code = jnp.concatenate([codes[:, 0, :], codes[:, 1, :], codes[:, 2, :]], axis=1)
    return mlp_head(gnn_code, params["head"])


# ---------------------------------------------------------------------------
# Pure-JAX reference mirroring the PyTorch forward
# ---------------------------------------------------------------------------
def _leaky(x, slope):
    return jnp.where(x >= 0, x, slope * x)


def _gil_ref(node_info, edge_attr, adj, p):
    B, N, D1 = node_info.shape
    recv = jnp.broadcast_to(node_info[:, :, None, :], (B, N, N, D1))
    send = jnp.broadcast_to(node_info[:, None, :, :], (B, N, N, D1))
    edge_input = jnp.concatenate([edge_attr, recv, send], axis=3)
    edge_code = _leaky(edge_input @ p["We"].T + p["be"], 0.01)
    edge_agg = (edge_code * adj[:, :, :, None]).sum(axis=2)
    node_input = jnp.concatenate([node_info, edge_agg], axis=2)
    return node_input @ p["Wn"].T + p["bn"]


def _pt_gnn_ref(node_attr, edge_attr1, edge_attr2, adj, gnn_layers, params):
    def run_encoder(edge_attr, gin_p):
        x = _leaky(node_attr @ params["enc"]["W"].T + params["enc"]["b"], 0.1)
        for _ in range(gnn_layers):
            node_info = jnp.concatenate([x, node_attr], axis=2)
            x = _leaky(_gil_ref(node_info, edge_attr, adj, gin_p), 0.01)
        return x

    codes = jnp.concatenate([run_encoder(edge_attr1, params["gin1"]),
                             run_encoder(edge_attr2, params["gin2"])], axis=2)
    gnn_code = jnp.concatenate([codes[:, 0, :], codes[:, 1, :], codes[:, 2, :]], axis=1)
    h = jnp.tanh(gnn_code @ params["head"]["W1"].T + params["head"]["b1"])
    h = jnp.tanh(h @ params["head"]["W2"].T + params["head"]["b2"])
    h = h @ params["head"]["W3"].T + params["head"]["b3"]
    return jax.nn.sigmoid(h)


if __name__ == "__main__":
    B, N = 2, 32
    A = 4            # len_node_attr (PT_GNN's layer chaining requires n_node_attr == 4)
    H = 32           # len_hidden (nhid == n_edge_code)
    D3 = 4           # len_edge_attr
    OUT = 1          # output_size
    GNN_LAYERS = 2

    D1 = A + H       # GIL node_info width
    De = H
    Do = D1 - 4      # == H

    key = jax.random.PRNGKey(0)
    _keys = iter(jax.random.split(key, 24))

    def nk():
        return next(_keys)

    def rnd(shape, scale=0.1):
        return jax.random.normal(nk(), shape, jnp.float32) * scale

    node_attr = rnd((B, N, A), 1.0)
    edge_attr1 = rnd((B, N, N, D3), 1.0)
    edge_attr2 = rnd((B, N, N, D3), 1.0)
    adj = (jax.random.uniform(nk(), (B, N, N)) > 0.5).astype(jnp.float32)

    def gil_params():
        return {"We": rnd((De, D3 + 2 * D1)), "be": rnd((De,)),
                "Wn": rnd((Do, D1 + De)), "bn": rnd((Do,))}

    params = {
        "enc": {"W": rnd((H, A)), "b": rnd((H,))},
        "gin1": gil_params(),
        "gin2": gil_params(),
        "head": {"W1": rnd((128, 6 * H)), "b1": rnd((128,)),
                 "W2": rnd((64, 128)), "b2": rnd((64,)),
                 "W3": rnd((OUT, 64)), "b3": rnd((OUT,))},
    }

    out = pt_gnn_forward(node_attr, edge_attr1, edge_attr2, adj, GNN_LAYERS, params)
    out = jax.block_until_ready(out)

    ref = _pt_gnn_ref(node_attr, edge_attr1, edge_attr2, adj, GNN_LAYERS, params)
    assert out.shape == (B, OUT), out.shape
    assert jnp.allclose(out, ref, atol=2e-4, rtol=2e-4), "mismatch vs reference"

    print("KERNEL_OK")
</pallas_src>

<mosaic_0001>
module attributes {stable_mosaic.version = 11 : i64} {
  func.func @_node_encoder_kernel(%arg0: memref<2x32x4xf32, #tpu.memory_space<vmem>>, %arg1: memref<4x32xf32, #tpu.memory_space<vmem>>, %arg2: memref<1x32xf32, #tpu.memory_space<vmem>>, %arg3: memref<2x32x32xf32, #tpu.memory_space<vmem>>) attributes {dimension_semantics = [], scalar_prefetch = 0 : i64, scratch_operands = 0 : i64, tpu.core_type = #tpu.core_type<tc>} {
    %c0 = arith.constant 0 : index
    %c0_0 = arith.constant 0 : index
    %c0_1 = arith.constant 0 : index
    %0 = vector.load %arg0[%c0, %c0_0, %c0_1] : memref<2x32x4xf32, #tpu.memory_space<vmem>>, vector<2x32x4xf32>
    %1 = vector.shape_cast %0 : vector<2x32x4xf32> to vector<64x4xf32>
    %c0_2 = arith.constant 0 : index
    %c0_3 = arith.constant 0 : index
    %2 = vector.load %arg1[%c0_2, %c0_3] : memref<4x32xf32, #tpu.memory_space<vmem>>, vector<4x32xf32>
    %cst = arith.constant dense<0.000000e+00> : vector<64x32xf32>
    %3 = tpu.matmul %1, %2, %cst {dimension_numbers = #tpu.dot_dimension_numbers<[1], [0], [0], [1], [0, 0, 1, 1], [], []>} : vector<64x4xf32>, vector<4x32xf32>, vector<64x32xf32> -> vector<64x32xf32>
    %c0_4 = arith.constant 0 : index
    %c0_5 = arith.constant 0 : index
    %4 = vector.load %arg2[%c0_4, %c0_5] : memref<1x32xf32, #tpu.memory_space<vmem>>, vector<1x32xf32>
    %5 = vector.shape_cast %4 : vector<1x32xf32> to vector<32xf32>
    %6 = vector.shape_cast %5 : vector<32xf32> to vector<1x32xf32>
    %7 = vector.broadcast %6 : vector<1x32xf32> to vector<64x32xf32>
    %8 = arith.addf %3, %7 : vector<64x32xf32>
    %cst_6 = arith.constant 1.000000e-01 : f32
    %9 = vector.broadcast %cst_6 : f32 to vector<64x32xf32>
    %10 = arith.mulf %9, %8 : vector<64x32xf32>
    %11 = arith.maximumf %8, %10 : vector<64x32xf32>
    %12 = vector.shape_cast %11 : vector<64x32xf32> to vector<2x32x32xf32>
    %c0_7 = arith.constant 0 : index
    %c0_8 = arith.constant 0 : index
    %c0_9 = arith.constant 0 : index
    %13 = vector.load %arg3[%c0_7, %c0_8, %c0_9] : memref<2x32x32xf32, #tpu.memory_space<vmem>>, vector<2x32x32xf32>
    tpu.vector_store %arg3[%c0_7, %c0_8, %c0_9], %12 {strides = array<i32>} : memref<2x32x32xf32, #tpu.memory_space<vmem>>, vector<2x32x32xf32>,
    return
  }
}

</mosaic_0001>

<llo_original>
// kernel: tpu_custom_call.1
$region0: #{tpu_custom_call.1}
  #allocation0 [shape = 'u32[]', space=smem, size = 0x4, offset = 0x4, fixed_abs, tag = 'smem constant byte address 0x4 - core index']
  #allocation1 [shape = 'u32[144,128]{1,0:T(1,128)}', space=vmem, size = 0x12000, scoped, tag = 'internal scratch']
  %s0 = inlined_call_operand.vmem [shape: f32[2,32,4], index: 0, kind: input, shape index: {}]
  %s1 = inlined_call_operand.vmem [shape: f32[4,32], index: 1, kind: input, shape index: {}]
  %s2 = inlined_call_operand.vmem [shape: f32[1,32], index: 2, kind: input, shape index: {}]
  %s3 = inlined_call_operand.hbm [shape: f32[2,32,32], index: 3, kind: output, shape index: {}]
  %s4 = sld [smem:[#allocation0]]
  $region22: #{tpu_custom_call.1} parent=0
    _
  %s6 = ssub.s32 1, %s4
  %s7 = scalar_select 0, %s6, %s4
  $region1: #{tpu_custom_call.1} parent=0
    #allocation2 [shape = 'u8[32768]{0}', space=vmem, size = 0x8000, scoped, tag = 'output window, operand 0, single buffered']
    #allocation3 [shape = 's32[1]{0}', space=sflag, size = 0x4, scoped, tag = 'scoped memory for tpu_custom_call.1']
    %8 = vsyncpa [#allocation3], 0
    // Predicated region
    $region2: #{tpu_custom_call.1} parent=1 // pred_check
      _
    $region3: #{tpu_custom_call.1} parent=1 // pred_check_branch
      %10 = sbr.rel (0) target = $region5
    $region4: #{tpu_custom_call.1} parent=1 // pred_region
      _
    $region5: #{tpu_custom_call.1} parent=1 // pred_fallthru
      _
    // Predicated region
    $region6: #{tpu_custom_call.1} parent=1 // pred_check
      _
    $region7: #{tpu_custom_call.1} parent=1 // pred_check_branch
      %12 = sbr.rel (0) target = $region9
    $region8: #{tpu_custom_call.1} parent=1 // pred_region
      _
    $region9: #{tpu_custom_call.1} parent=1 // pred_fallthru
      _
    // Predicated region
    $region10: #{tpu_custom_call.1} parent=1 // pred_check
      _
    $region11: #{tpu_custom_call.1} parent=1 // pred_check_branch
      %14 = sbr.rel (0) target = $region13
    $region12: #{tpu_custom_call.1} parent=1 // pred_region
      _
    $region13: #{tpu_custom_call.1} parent=1 // pred_fallthru
      _
    %v15 = vld [vmem:[%s0] sm:$0xff]
    %v16 = vld [vmem:[%s0 + $0x8] sm:$0xff]
    %v17 = vld [vmem:[%s0 + $0x10] sm:$0xff]
    %v18 = vld [vmem:[%s0 + $0x18] sm:$0xff]
    %v19 = vld [vmem:[%s0 + $0x20] sm:$0xff]
    %v20 = vld [vmem:[%s0 + $0x28] sm:$0xff]
    %v21 = vld [vmem:[%s0 + $0x30] sm:$0xff]
    %v22 = vld [vmem:[%s0 + $0x38] sm:$0xff]
    %v23 = vld [vmem:[%s1] sm:$0xf]
    %v24 = vld [vmem:[%s2] sm:$0x1]
    %v26 = vlaneseq
    %v27 = vshrl.u32 %v26, 7
    %v28 = vsub.s32 0, %v27
    %v29 = vrot.slane %v24, %v28
    %vm31 = vcmask 31744
    %v33 = vsel %vm31, %v15, 0
    %v36 = vsel %vm31, %v16, 0
    %v39 = vsel %vm31, %v17, 0
    %v42 = vsel %vm31, %v18, 0
    %v45 = vsel %vm31, %v19, 0
    %v48 = vsel %vm31, %v20, 0
    %v51 = vsel %vm31, %v21, 0
    %v54 = vsel %vm31, %v22, 0
    %vm56 = vcmask 1043456
    %v58 = vsel %vm56, %v23, 0
    %60 = vmatprep.subr.mxu0 0.0
    %61 = vmatpush1.msra.mxu0 0.0
    %62 = vmatprep.subr.mxu0 0.0
    %63 = vmatpush1.msra.mxu0 0.0
    %64 = vmatprep.subr.mxu0 0.0
    %65 = vmatpush1.msra.mxu0 0.0
    %66 = vmatprep.subr.mxu0 0.0
    %67 = vmatpush1.msra.mxu0 0.0
    %68 = vmatprep.subr.mxu0 0.0
    %69 = vmatpush1.msra.mxu0 0.0
    %70 = vmatprep.subr.mxu0 0.0
    %71 = vmatpush1.msra.mxu0 0.0
    %72 = vmatprep.subr.mxu0 0.0
    %73 = vmatpush1.msra.mxu0 0.0
    %74 = vmatprep.subr.mxu0 0.0
    %75 = vmatpush1.msra.mxu0 0.0
    %76 = vmatprep.subr.mxu0 0.0
    %77 = vmatpush1.msra.mxu0 0.0
    %78 = vmatprep.subr.mxu0 0.0
    %79 = vmatpush1.msra.mxu0 0.0
    %80 = vmatprep.subr.mxu0 0.0
    %81 = vmatpush1.msra.mxu0 0.0
    %82 = vmatprep.subr.mxu0 0.0
    %83 = vmatpush1.msra.mxu0 0.0
    %84 = vmatprep.subr.mxu0 0.0
    %85 = vmatpush1.msra.mxu0 0.0
    %86 = vmatprep.subr.mxu0 0.0
    %87 = vmatpush1.msra.mxu0 0.0
    %88 = vmatprep.subr.mxu0 0.0
    %89 = vmatpush1.msra.mxu0 0.0
    %90 = vmatprep.subr.mxu0 0.0
    %91 = vmatpush1.msra.mxu0 %v58
    %92 = vmatprep.subr.mxu0 0.0
    %93 = vmatpush2.msra.mxu0 0.0
    %94 = vmatprep.subr.mxu0 0.0
    %95 = vmatpush2.msra.mxu0 0.0
    %96 = vmatprep.subr.mxu0 0.0
    %97 = vmatpush2.msra.mxu0 0.0
    %98 = vmatprep.subr.mxu0 0.0
    %99 = vmatpush2.msra.mxu0 0.0
    %100 = vmatprep.subr.mxu0 0.0
    %101 = vmatpush2.msra.mxu0 0.0
    %102 = vmatprep.subr.mxu0 0.0
    %103 = vmatpush2.msra.mxu0 0.0
    %104 = vmatprep.subr.mxu0 0.0
    %105 = vmatpush2.msra.mxu0 0.0
    %106 = vmatprep.subr.mxu0 0.0
    %107 = vmatpush2.msra.mxu0 0.0
    %108 = vmatprep.subr.mxu0 0.0
    %109 = vmatpush2.msra.mxu0 0.0
    %110 = vmatprep.subr.mxu0 0.0
    %111 = vmatpush2.msra.mxu0 0.0
    %112 = vmatprep.subr.mxu0 0.0
    %113 = vmatpush2.msra.mxu0 0.0
    %114 = vmatprep.subr.mxu0 0.0
    %115 = vmatpush2.msra.mxu0 0.0
    %116 = vmatprep.subr.mxu0 0.0
    %117 = vmatpush2.msra.mxu0 0.0
    %118 = vmatprep.subr.mxu0 0.0
    %119 = vmatpush2.msra.mxu0 0.0
    %120 = vmatprep.subr.mxu0 0.0
    %121 = vmatpush2.msra.mxu0 0.0
    %122 = vmatprep.subr.mxu0 0.0
    %123 = vmatpush2.msra.mxu0 0.0
    %124 = vmatprep.mubr.f32.mxu0 0.0
    %125 = vmatmul.mubr.f32.gmra.mxu0 %v33
    %v126 = vpop.f32.mrf.mxu0
    %v127 = vadd.f32 %v29, %v126
    %v128 = vpop.f32.mrf.mxu0
    %129 = vmatprep.mubr.f32.mxu0 0.0
    %130 = vmatmul.mubr.f32.gmra.mxu0 %v36
    %v131 = vpop.f32.mrf.mxu0
    %v132 = vadd.f32 %v29, %v131
    %v133 = vpop.f32.mrf.mxu0
    %134 = vmatprep.mubr.f32.mxu0 0.0
    %135 = vmatmul.mubr.f32.gmra.mxu0 %v39
    %v136 = vpop.f32.mrf.mxu0
    %v137 = vadd.f32 %v29, %v136
    %v138 = vpop.f32.mrf.mxu0
    %139 = vmatprep.mubr.f32.mxu0 0.0
    %140 = vmatmul.mubr.f32.gmra.mxu0 %v42
    %v141 = vpop.f32.mrf.mxu0
    %v142 = vadd.f32 %v29, %v141
    %v143 = vpop.f32.mrf.mxu0
    %144 = vmatprep.mubr.f32.mxu0 0.0
    %145 = vmatmul.mubr.f32.gmra.mxu0 %v45
    %v146 = vpop.f32.mrf.mxu0
    %v147 = vadd.f32 %v29, %v146
    %v148 = vpop.f32.mrf.mxu0
    %149 = vmatprep.mubr.f32.mxu0 0.0
    %150 = vmatmul.mubr.f32.gmra.mxu0 %v48
    %v151 = vpop.f32.mrf.mxu0
    %v152 = vadd.f32 %v29, %v151
    %v153 = vpop.f32.mrf.mxu0
    %154 = vmatprep.mubr.f32.mxu0 0.0
    %155 = vmatmul.mubr.f32.gmra.mxu0 %v51
    %v156 = vpop.f32.mrf.mxu0
    %v157 = vadd.f32 %v29, %v156
    %v158 = vpop.f32.mrf.mxu0
    %159 = vmatprep.mubr.f32.mxu0 0.0
    %160 = vmatmul.mubr.f32.gmra.mxu0 %v54
    %v161 = vpop.f32.mrf.mxu0
    %v162 = vadd.f32 %v29, %v161
    %v163 = vpop.f32.mrf.mxu0
    %164 = vdwg.mxu0
    %v165 = vmul.f32 %v127, 0.1
    %v166 = vmul.f32 %v132, 0.1
    %v167 = vmul.f32 %v137, 0.1
    %v168 = vmul.f32 %v142, 0.1
    %v169 = vmul.f32 %v147, 0.1
    %v170 = vmul.f32 %v152, 0.1
    %v171 = vmul.f32 %v157, 0.1
    %v172 = vmul.f32 %v162, 0.1
    %v173 = vmax.f32 %v127, %v165
    %v174 = vmax.f32 %v132, %v166
    %v175 = vmax.f32 %v137, %v167
    %v176 = vmax.f32 %v142, %v168
    %v177 = vmax.f32 %v147, %v169
    %v178 = vmax.f32 %v152, %v170
    %v179 = vmax.f32 %v157, %v171
    %v180 = vmax.f32 %v162, %v172
    %vm181 = vcmask 261120
    %182 = vst.msk [vmem:[#allocation2] sm:$0xff] %vm181, %v173
    %183 = vst.msk [vmem:[#allocation2 + $0x8] sm:$0xff] %vm181, %v174
    %184 = vst.msk [vmem:[#allocation2 + $0x10] sm:$0xff] %vm181, %v175
    %185 = vst.msk [vmem:[#allocation2 + $0x18] sm:$0xff] %vm181, %v176
    %186 = vst.msk [vmem:[#allocation2 + $0x20] sm:$0xff] %vm181, %v177
    %187 = vst.msk [vmem:[#allocation2 + $0x28] sm:$0xff] %vm181, %v178
    %188 = vst.msk [vmem:[#allocation2 + $0x30] sm:$0xff] %vm181, %v179
    %189 = vst.msk [vmem:[#allocation2 + $0x38] sm:$0xff] %vm181, %v180
    // Predicated region
    $region14: #{tpu_custom_call.1} parent=1 // pred_check
      _
    $region15: #{tpu_custom_call.1} parent=1 // pred_check_branch
      %191 = sbr.rel (0) target = $region17
    $region16: #{tpu_custom_call.1} parent=1 // pred_region
      %s193 = ssub.s32 1024, 1024
      %194 = vsyncadd [#allocation3], %s193
      %s195 = sshll.u32 [#allocation2], 4
      %s196 = int_to_ptr.vmem [resolvable:$true] %s195
      %201 = dma.vmem_to_hbm [thread:$0]  %s196, 1024, %s3, [#allocation3], 128, 128, 8
    $region17: #{tpu_custom_call.1} parent=1 // pred_fallthru
      _
    // Predicated region
    $region18: #{tpu_custom_call.1} parent=1 // pred_check
      _
    $region19: #{tpu_custom_call.1} parent=1 // pred_check_branch
      %203 = sbr.rel (0) target = $region21
    $region20: #{tpu_custom_call.1} parent=1 // pred_region
      %204 = dma.done [#allocation3], 1024
    $region21: #{tpu_custom_call.1} parent=1 // pred_fallthru
      _
    %205 = vsyncpa [#allocation3], 1

</llo_original>
